<compile_context>
chip_gen: v6e
topology: v6e:2x2x1
jax: 0.10.0
libtpu: 0.0.40
codegen_flags: <defaults>
</compile_context>

<pallas_src>
import functools

import jax
import jax.numpy as jnp
from jax.experimental import pallas as pl
from jax.experimental.pallas import tpu as pltpu


# --------------------------------- kernel -----------------------------------
def _temporal_block_kernel(x_ref, w1_ref, b1_ref, w2_ref, b2_ref, wd_ref, bd_ref,
                           *out_refs, B, L, K, dilation, c_in, c_out,
                           has_downsample, fold1, fold2, write_net):
    """One batch block per grid step.

    x_ref  : (B, L, Cin)        input block, NLC, compute dtype
    w1_ref : (K*Cin, Cout)      folded conv1 weight (tap axis pre-reversed)
    w2_ref : (K*Cout, Cout)     folded conv2 weight (tap axis pre-reversed)
    b*_ref : (1, Cout)          f32 biases
    wd_ref : (Cin, Cout)        1x1 downsample weight (ignored for identity residual)
    out_refs: (y_ref[, net_ref]) — relu(out+res) and optionally the net branch
    """
    x = x_ref[...]                                    # (B, L, Cin), compute dtype

    def shifted(v, s):
        # tap[:, l, :] = v[:, l - s, :]  with zeros for l < s (causal left pad),
        # built in compute dtype with an aligned-start slice — no (L+pad)
        # scratch buffer, no f32 round trip.
        if s == 0:
            return v
        zeros = jnp.zeros((v.shape[0], s, v.shape[2]), v.dtype)
        return jnp.concatenate([zeros, v[:, :v.shape[1] - s, :]], axis=1)

    def causal_conv(v, w_ref, b_ref, c, fold):
        # v: (B, L, c); weight rows [s*c, (s+1)*c) correspond to the tap
        # shifted by s*dilation (kernel-tap axis reversed in the wrapper).
        if fold:
            # Small c: fold the K taps into ONE deep MXU contraction.
            taps = jnp.concatenate(
                [shifted(v, s * dilation) for s in range(K)], axis=-1)  # (B,L,K*c)
            acc = jnp.dot(taps.reshape(B * L, K * c), w_ref[...],
                          preferred_element_type=jnp.float32)
        else:
            # c already >= MXU contraction depth: K accumulating matmuls, no
            # Kx-sized im2col temporary (saves VMEM, esp. on v7x's 64 MiB).
            w = w_ref[...]
            acc = jnp.zeros((B * L, c_out), jnp.float32)
            for s in range(K):
                acc = acc + jnp.dot(
                    shifted(v, s * dilation).reshape(B * L, c),
                    w[s * c:(s + 1) * c, :],
                    preferred_element_type=jnp.float32)
        return jnp.maximum(acc + b_ref[...], 0.0)     # (B*L, Cout) f32

    # conv1 -> ReLU   (dropout1 = identity in eval mode)
    h1 = causal_conv(x, w1_ref, b1_ref, c_in, fold1)
    # conv2 -> ReLU   (dropout2 = identity in eval mode)
    out = causal_conv(h1.reshape(B, L, c_out).astype(x.dtype),
                      w2_ref, b2_ref, c_out, fold2)

    # residual branch
    if has_downsample:
        res = jnp.dot(x.reshape(B * L, c_in), wd_ref[...],
                      preferred_element_type=jnp.float32) + bd_ref[...]
    else:
        res = x.reshape(B * L, c_out).astype(jnp.float32)   # identity (Cin == Cout)

    y_ref = out_refs[0]
    y_ref[...] = jnp.maximum(out + res, 0.0).reshape(B, L, c_out).astype(y_ref.dtype)
    if write_net:
        net_ref = out_refs[1]
        net_ref[...] = out.reshape(B, L, c_out).astype(net_ref.dtype)


# ------------------------------ wrapper helpers ------------------------------
def _vmem_capacity_bytes():
    try:
        cap = getattr(pltpu.get_tpu_info(), "vmem_capacity_bytes", None)
        if cap:
            return int(cap)
    except Exception:
        pass
    return 128 * 1024 * 1024


def _default_fold_threshold():
    # MXU contraction depth: 128 on v4/v5e, 256 on v6e/v7x.  Folding the K taps
    # only deepens the contraction usefully when the channel count is below it.
    try:
        kind = jax.devices()[0].device_kind.lower()
    except Exception:
        return 256
    if "v5 lite" in kind or "v5e" in kind or "v5litepod" in kind or "v4" in kind:
        return 128
    return 256


def temporal_block_pallas_nlc(x_nlc, w1_eff, b1, w2_eff, b2, wd, bd, *,
                              dilation, stride=1,
                              compute_dtype=jnp.float32,
                              out_dtype=jnp.float32,
                              return_net=True,
                              fold_threshold=None,
                              vmem_limit_bytes=None,
                              block_budget_bytes=None,
                              min_grid_steps=4):
    """NLC-native entry: x (N, L, Cin) -> relu(out+res)[, out] in (N, L, Cout).

    Pass wd=None / bd=None for the identity-residual case (Cin == Cout).
    """
    # TODO(synk): stride > 1 is not implemented (canonical TCN uses stride=1).
    assert stride == 1, "stride > 1 not supported"
    N, L, c_in = x_nlc.shape
    c_out, _, K = w1_eff.shape              # torch weight layout (Cout, Cin, K)

    has_downsample = wd is not None
    if not has_downsample:
        assert c_in == c_out, "identity residual requires Cin == Cout"
        wd = jnp.zeros((c_out, c_in, 1), jnp.float32)   # dummy, ignored by kernel
        bd = jnp.zeros((c_out,), jnp.float32)

    # ---- generation-aware VMEM budget (v7x: 64 MiB/TC, v5e/v6e: 128 MiB) ----
    cap = _vmem_capacity_bytes()
    if vmem_limit_bytes is None:
        vmem_limit_bytes = int(cap * 0.82)
    if block_budget_bytes is None:
        block_budget_bytes = int(cap * 0.35)
    if fold_threshold is None:
        fold_threshold = _default_fold_threshold()
    fold1 = c_in < fold_threshold
    fold2 = c_out < fold_threshold

    # Fold the K taps into the weight with the kernel-tap axis REVERSED so that
    # the tap shifted by s*dilation pairs with the correct torch weight tap:
    # w_flat[s*C + i, o] = W[o, i, K-1-s].
    def fold_w(w, c):
        return jnp.transpose(w[:, :, ::-1], (2, 1, 0)).reshape(
            K * c, c_out).astype(compute_dtype)

    w1_k = fold_w(w1_eff, c_in)
    w2_k = fold_w(w2_eff, c_out)
    wd_k = jnp.transpose(wd[:, :, 0], (1, 0)).astype(compute_dtype)
    b1_k = b1.reshape(1, c_out).astype(jnp.float32)
    b2_k = b2.reshape(1, c_out).astype(jnp.float32)
    bd_k = bd.reshape(1, c_out).astype(jnp.float32)

    x_c = x_nlc.astype(compute_dtype)
    cs = jnp.dtype(compute_dtype).itemsize
    osz = jnp.dtype(out_dtype).itemsize
    n_out = 2 if return_net else 1

    # Per-batch-row VMEM: double-buffered pipeline I/O + live temporaries
    # (compute-dtype taps + f32 accumulators), with 2x headroom for relayout /
    # Mosaic-internal scratch.
    io_per_row = 2 * L * (c_in * cs + n_out * c_out * osz)
    taps1 = (K * c_in if fold1 else 2 * c_in) * cs
    taps2 = (K * c_out if fold2 else 2 * c_out) * cs
    tmp_per_row = 2 * L * (taps1 + taps2 + (c_in + c_out) * cs
                           + (3 * c_out + c_in) * 4)
    per_row = max(1, io_per_row + tmp_per_row)
    b_max = max(1, block_budget_bytes // per_row)

    # Keep >= ~min_grid_steps grid steps (DMA/compute overlap, megacore) while
    # staying within the VMEM budget.  cdiv grid: no divisor snapping, so B_blk
    # never collapses to 1 for awkward N (boundary blocks are masked by Pallas).
    target = max(1, pl.cdiv(N, max(1, min_grid_steps)))
    B_blk = int(max(1, min(b_max, target, N)))
    grid = (pl.cdiv(N, B_blk),)

    kernel = functools.partial(
        _temporal_block_kernel, B=B_blk, L=L, K=K, dilation=dilation,
        c_in=c_in, c_out=c_out, has_downsample=has_downsample,
        fold1=fold1, fold2=fold2, write_net=return_net)

    out_shapes = [jax.ShapeDtypeStruct((N, L, c_out), out_dtype)]
    out_specs = [pl.BlockSpec((B_blk, L, c_out), lambda n: (n, 0, 0))]
    if return_net:
        out_shapes.append(jax.ShapeDtypeStruct((N, L, c_out), out_dtype))
        out_specs.append(pl.BlockSpec((B_blk, L, c_out), lambda n: (n, 0, 0)))

    outs = pl.pallas_call(
        kernel,
        out_shape=tuple(out_shapes),
        grid_spec=pltpu.PrefetchScalarGridSpec(
            num_scalar_prefetch=0,
            grid=grid,
            in_specs=[
                pl.BlockSpec((B_blk, L, c_in), lambda n: (n, 0, 0)),
                pl.BlockSpec((K * c_in, c_out), lambda n: (0, 0)),
                pl.BlockSpec((1, c_out), lambda n: (0, 0)),
                pl.BlockSpec((K * c_out, c_out), lambda n: (0, 0)),
                pl.BlockSpec((1, c_out), lambda n: (0, 0)),
                pl.BlockSpec((c_in, c_out), lambda n: (0, 0)),
                pl.BlockSpec((1, c_out), lambda n: (0, 0)),
            ],
            out_specs=out_specs,
        ),
        compiler_params=pltpu.CompilerParams(
            dimension_semantics=("parallel",),          # batch axis: megacore on v7x
            vmem_limit_bytes=vmem_limit_bytes),
    )(x_c, w1_k, b1_k, w2_k, b2_k, wd_k, bd_k)

    if return_net:
        return outs[0], outs[1]
    return outs[0] if isinstance(outs, (tuple, list)) else outs


def temporal_block_pallas(x_ncl, w1_eff, b1, w2_eff, b2, wd, bd, *, dilation,
                          return_net=True, **kw):
    """PyTorch-layout entry: x (N, Cin, L) -> relu(out+res)[, out] in (N, Cout, L).

    Only the NCL<->NLC boundary transposes live here; NLC pipelines should call
    temporal_block_pallas_nlc directly and skip them.
    """
    x_nlc = jnp.transpose(x_ncl, (0, 2, 1))
    res = temporal_block_pallas_nlc(x_nlc, w1_eff, b1, w2_eff, b2, wd, bd,
                                    dilation=dilation, return_net=return_net, **kw)
    if return_net:
        y, net = res
        return jnp.transpose(y, (0, 2, 1)), jnp.transpose(net, (0, 2, 1))
    return jnp.transpose(res, (0, 2, 1))


# -------------------- parameter construction / reference --------------------
def _weight_norm(v, g):
    """v: (Cout, Cin, K), g: (Cout,) -> g * v / ||v|| (norm over (Cin, K) per out-ch)."""
    nrm = jnp.sqrt(jnp.sum(v * v, axis=(1, 2), keepdims=True))
    return g[:, None, None] * v / nrm


def _reference(x_ncl, w1_eff, b1, w2_eff, b2, wd, bd, dilation):
    """Pure-JAX reference using lax.conv_general_dilated (NCL layout)."""
    def causal(x, w, b):
        P = (w.shape[2] - 1) * dilation
        xp = jnp.pad(x, ((0, 0), (0, 0), (P, 0)))
        y = jax.lax.conv_general_dilated(
            xp, w, window_strides=(1,), padding='VALID',
            rhs_dilation=(dilation,), dimension_numbers=('NCH', 'OIH', 'NCH'))
        return y + b[None, :, None]

    h1 = jax.nn.relu(causal(x_ncl, w1_eff, b1))
    out = jax.nn.relu(causal(h1, w2_eff, b2))
    if wd is None:
        res = x_ncl
    else:
        res = jax.lax.conv_general_dilated(
            x_ncl, wd, window_strides=(1,), padding='VALID',
            dimension_numbers=('NCH', 'OIH', 'NCH')) + bd[None, :, None]
    return jax.nn.relu(out + res), out


if __name__ == "__main__":
    # Small, module-consistent shapes.
    N, C_IN, C_OUT, L = 2, 4, 8, 16
    K, STRIDE, DILATION = 3, 1, 2

    key = jax.random.PRNGKey(0)
    ks = jax.random.split(key, 11)

    x = jax.random.normal(ks[0], (N, C_IN, L), jnp.float32)

    # conv weights ~ N(0, 0.01) per init_weights(); weight_norm gains, small biases.
    v1 = 0.01 * jax.random.normal(ks[1], (C_OUT, C_IN, K), jnp.float32)
    g1 = 0.5 + jax.random.uniform(ks[2], (C_OUT,), jnp.float32)
    b1 = 0.1 * jax.random.normal(ks[3], (C_OUT,), jnp.float32)
    v2 = 0.01 * jax.random.normal(ks[4], (C_OUT, C_OUT, K), jnp.float32)
    g2 = 0.5 + jax.random.uniform(ks[5], (C_OUT,), jnp.float32)
    b2 = 0.1 * jax.random.normal(ks[6], (C_OUT,), jnp.float32)
    wd = 0.01 * jax.random.normal(ks[7], (C_OUT, C_IN, 1), jnp.float32)  # downsample
    bd = 0.1 * jax.random.normal(ks[8], (C_OUT,), jnp.float32)

    w1_eff = _weight_norm(v1, g1)
    w2_eff = _weight_norm(v2, g2)

    y_ref, net_ref = _reference(x, w1_eff, b1, w2_eff, b2, wd, bd, DILATION)

    # --- case 1: Cin != Cout (1x1 downsample residual), f32, folded taps ---
    y, net = temporal_block_pallas(x, w1_eff, b1, w2_eff, b2, wd, bd, dilation=DILATION)
    y = jax.block_until_ready(y)
    net = jax.block_until_ready(net)
    assert jnp.allclose(y, y_ref, atol=1e-5, rtol=1e-5), "relu(out+res) mismatch (f32)"
    assert jnp.allclose(net, net_ref, atol=1e-5, rtol=1e-5), "net branch mismatch (f32)"

    # --- case 2: bf16 MXU feeds (f32 accumulation), loose tolerance ---
    y16, net16 = temporal_block_pallas(x, w1_eff, b1, w2_eff, b2, wd, bd,
                                       dilation=DILATION, compute_dtype=jnp.bfloat16)
    y16 = jax.block_until_ready(y16)
    net16 = jax.block_until_ready(net16)
    assert jnp.allclose(y16, y_ref, atol=5e-2, rtol=5e-2), "relu(out+res) mismatch (bf16)"
    assert jnp.allclose(net16, net_ref, atol=5e-2, rtol=5e-2), "net branch mismatch (bf16)"

    # --- case 3: Cin == Cout -> identity residual (downsample=None) ---
    x_sq = jax.random.normal(ks[9], (N, C_OUT, L), jnp.float32)
    v1s = 0.01 * jax.random.normal(ks[10], (C_OUT, C_OUT, K), jnp.float32)
    w1s_eff = _weight_norm(v1s, g1)
    y_s, net_s = temporal_block_pallas(x_sq, w1s_eff, b1, w2_eff, b2, None, None,
                                       dilation=DILATION)
    y_s = jax.block_until_ready(y_s)
    net_s = jax.block_until_ready(net_s)
    ys_ref, nets_ref = _reference(x_sq, w1s_eff, b1, w2_eff, b2, None, None, DILATION)
    assert jnp.allclose(y_s, ys_ref, atol=1e-5, rtol=1e-5), "identity-residual mismatch"
    assert jnp.allclose(net_s, nets_ref, atol=1e-5, rtol=1e-5), "identity net mismatch"

    # --- case 4: force the non-folded (K accumulating matmuls) path ---
    y_nf, net_nf = temporal_block_pallas(x, w1_eff, b1, w2_eff, b2, wd, bd,
                                         dilation=DILATION, fold_threshold=1)
    y_nf = jax.block_until_ready(y_nf)
    net_nf = jax.block_until_ready(net_nf)
    assert jnp.allclose(y_nf, y_ref, atol=1e-5, rtol=1e-5), "non-fold y mismatch"
    assert jnp.allclose(net_nf, net_ref, atol=1e-5, rtol=1e-5), "non-fold net mismatch"

    # --- case 5: single-output mode (net branch not written back) ---
    y_only = temporal_block_pallas(x, w1_eff, b1, w2_eff, b2, wd, bd,
                                   dilation=DILATION, return_net=False)
    y_only = jax.block_until_ready(y_only)
    assert jnp.allclose(y_only, y_ref, atol=1e-5, rtol=1e-5), "return_net=False mismatch"

    print("KERNEL_OK")
</pallas_src>

<mosaic_0001>
module attributes {stable_mosaic.version = 11 : i64} {
  func.func @_temporal_block_kernel(%arg0: i32, %arg1: memref<1x16x4xf32, #tpu.memory_space<vmem>>, %arg2: memref<12x8xf32, #tpu.memory_space<vmem>>, %arg3: memref<1x8xf32, #tpu.memory_space<vmem>>, %arg4: memref<24x8xf32, #tpu.memory_space<vmem>>, %arg5: memref<1x8xf32, #tpu.memory_space<vmem>>, %arg6: memref<4x8xf32, #tpu.memory_space<vmem>>, %arg7: memref<1x8xf32, #tpu.memory_space<vmem>>, %arg8: memref<1x16x8xf32, #tpu.memory_space<vmem>>, %arg9: memref<1x16x8xf32, #tpu.memory_space<vmem>>) attributes {dimension_semantics = [#tpu.dimension_semantics<parallel>], iteration_bounds = array<i64: 2>, scalar_prefetch = 0 : i64, scratch_operands = 0 : i64, tpu.core_type = #tpu.core_type<tc>, window_params = [{transform_indices = @transform_0, window_bounds = array<i64: 1, 16, 4>}, {pipeline_mode = #tpu.pipeline_mode<synchronous>, transform_indices = @transform_1, window_bounds = array<i64: 12, 8>}, {pipeline_mode = #tpu.pipeline_mode<synchronous>, transform_indices = @transform_2, window_bounds = array<i64: 1, 8>}, {pipeline_mode = #tpu.pipeline_mode<synchronous>, transform_indices = @transform_3, window_bounds = array<i64: 24, 8>}, {pipeline_mode = #tpu.pipeline_mode<synchronous>, transform_indices = @transform_4, window_bounds = array<i64: 1, 8>}, {pipeline_mode = #tpu.pipeline_mode<synchronous>, transform_indices = @transform_5, window_bounds = array<i64: 4, 8>}, {pipeline_mode = #tpu.pipeline_mode<synchronous>, transform_indices = @transform_6, window_bounds = array<i64: 1, 8>}, {transform_indices = @transform_7, window_bounds = array<i64: 1, 16, 8>}, {transform_indices = @transform_8, window_bounds = array<i64: 1, 16, 8>}]} {
    %c0 = arith.constant 0 : index
    %c0_0 = arith.constant 0 : index
    %c0_1 = arith.constant 0 : index
    %0 = vector.load %arg1[%c0, %c0_0, %c0_1] : memref<1x16x4xf32, #tpu.memory_space<vmem>>, vector<1x16x4xf32>
    %cst = arith.constant 0.000000e+00 : f32
    %1 = vector.broadcast %cst : f32 to vector<1x2x4xf32>
    %2 = vector.extract_strided_slice %0 {offsets = [0, 0, 0], sizes = [1, 14, 4], strides = [1, 1, 1]} : vector<1x16x4xf32> to vector<1x14x4xf32>
    %3 = tpu.concatenate %1, %2 in 1 : vector<1x2x4xf32>, vector<1x14x4xf32> -> vector<1x16x4xf32>
    %cst_2 = arith.constant 0.000000e+00 : f32
    %4 = vector.broadcast %cst_2 : f32 to vector<1x4x4xf32>
    %5 = vector.extract_strided_slice %0 {offsets = [0, 0, 0], sizes = [1, 12, 4], strides = [1, 1, 1]} : vector<1x16x4xf32> to vector<1x12x4xf32>
    %6 = tpu.concatenate %4, %5 in 1 : vector<1x4x4xf32>, vector<1x12x4xf32> -> vector<1x16x4xf32>
    %7 = tpu.concatenate %0, %3, %6 in 2 : vector<1x16x4xf32>, vector<1x16x4xf32>, vector<1x16x4xf32> -> vector<1x16x12xf32>
    %8 = vector.shape_cast %7 : vector<1x16x12xf32> to vector<16x12xf32>
    %c0_3 = arith.constant 0 : index
    %c0_4 = arith.constant 0 : index
    %9 = vector.load %arg2[%c0_3, %c0_4] : memref<12x8xf32, #tpu.memory_space<vmem>>, vector<12x8xf32>
    %cst_5 = arith.constant dense<0.000000e+00> : vector<16x8xf32>
    %10 = tpu.matmul %8, %9, %cst_5 {dimension_numbers = #tpu.dot_dimension_numbers<[1], [0], [0], [1], [0, 0, 1, 1], [], []>} : vector<16x12xf32>, vector<12x8xf32>, vector<16x8xf32> -> vector<16x8xf32>
    %c0_6 = arith.constant 0 : index
    %c0_7 = arith.constant 0 : index
    %11 = vector.load %arg3[%c0_6, %c0_7] : memref<1x8xf32, #tpu.memory_space<vmem>>, vector<1x8xf32>
    %12 = vector.broadcast %11 : vector<1x8xf32> to vector<16x8xf32>
    %13 = arith.addf %10, %12 : vector<16x8xf32>
    %cst_8 = arith.constant 0.000000e+00 : f32
    %14 = vector.broadcast %cst_8 : f32 to vector<16x8xf32>
    %15 = arith.maximumf %13, %14 : vector<16x8xf32>
    %16 = vector.shape_cast %15 : vector<16x8xf32> to vector<1x16x8xf32>
    %cst_9 = arith.constant 0.000000e+00 : f32
    %17 = vector.broadcast %cst_9 : f32 to vector<1x2x8xf32>
    %18 = vector.extract_strided_slice %16 {offsets = [0, 0, 0], sizes = [1, 14, 8], strides = [1, 1, 1]} : vector<1x16x8xf32> to vector<1x14x8xf32>
    %19 = tpu.concatenate %17, %18 in 1 : vector<1x2x8xf32>, vector<1x14x8xf32> -> vector<1x16x8xf32>
    %cst_10 = arith.constant 0.000000e+00 : f32
    %20 = vector.broadcast %cst_10 : f32 to vector<1x4x8xf32>
    %21 = vector.extract_strided_slice %16 {offsets = [0, 0, 0], sizes = [1, 12, 8], strides = [1, 1, 1]} : vector<1x16x8xf32> to vector<1x12x8xf32>
    %22 = tpu.concatenate %20, %21 in 1 : vector<1x4x8xf32>, vector<1x12x8xf32> -> vector<1x16x8xf32>
    %23 = tpu.concatenate %16, %19, %22 in 2 : vector<1x16x8xf32>, vector<1x16x8xf32>, vector<1x16x8xf32> -> vector<1x16x24xf32>
    %24 = vector.shape_cast %23 : vector<1x16x24xf32> to vector<16x24xf32>
    %c0_11 = arith.constant 0 : index
    %c0_12 = arith.constant 0 : index
    %25 = vector.load %arg4[%c0_11, %c0_12] : memref<24x8xf32, #tpu.memory_space<vmem>>, vector<24x8xf32>
    %cst_13 = arith.constant dense<0.000000e+00> : vector<16x8xf32>
    %26 = tpu.matmul %24, %25, %cst_13 {dimension_numbers = #tpu.dot_dimension_numbers<[1], [0], [0], [1], [0, 0, 1, 1], [], []>} : vector<16x24xf32>, vector<24x8xf32>, vector<16x8xf32> -> vector<16x8xf32>
    %c0_14 = arith.constant 0 : index
    %c0_15 = arith.constant 0 : index
    %27 = vector.load %arg5[%c0_14, %c0_15] : memref<1x8xf32, #tpu.memory_space<vmem>>, vector<1x8xf32>
    %28 = vector.broadcast %27 : vector<1x8xf32> to vector<16x8xf32>
    %29 = arith.addf %26, %28 : vector<16x8xf32>
    %cst_16 = arith.constant 0.000000e+00 : f32
    %30 = vector.broadcast %cst_16 : f32 to vector<16x8xf32>
    %31 = arith.maximumf %29, %30 : vector<16x8xf32>
    %32 = vector.shape_cast %0 : vector<1x16x4xf32> to vector<16x4xf32>
    %c0_17 = arith.constant 0 : index
    %c0_18 = arith.constant 0 : index
    %33 = vector.load %arg6[%c0_17, %c0_18] : memref<4x8xf32, #tpu.memory_space<vmem>>, vector<4x8xf32>
    %cst_19 = arith.constant dense<0.000000e+00> : vector<16x8xf32>
    %34 = tpu.matmul %32, %33, %cst_19 {dimension_numbers = #tpu.dot_dimension_numbers<[1], [0], [0], [1], [0, 0, 1, 1], [], []>} : vector<16x4xf32>, vector<4x8xf32>, vector<16x8xf32> -> vector<16x8xf32>
    %c0_20 = arith.constant 0 : index
    %c0_21 = arith.constant 0 : index
    %35 = vector.load %arg7[%c0_20, %c0_21] : memref<1x8xf32, #tpu.memory_space<vmem>>, vector<1x8xf32>
    %36 = vector.broadcast %35 : vector<1x8xf32> to vector<16x8xf32>
    %37 = arith.addf %34, %36 : vector<16x8xf32>
    %38 = arith.addf %31, %37 : vector<16x8xf32>
    %cst_22 = arith.constant 0.000000e+00 : f32
    %39 = vector.broadcast %cst_22 : f32 to vector<16x8xf32>
    %40 = arith.maximumf %38, %39 : vector<16x8xf32>
    %41 = vector.shape_cast %40 : vector<16x8xf32> to vector<1x16x8xf32>
    %c0_23 = arith.constant 0 : index
    %c0_24 = arith.constant 0 : index
    %c0_25 = arith.constant 0 : index
    %42 = vector.load %arg8[%c0_23, %c0_24, %c0_25] : memref<1x16x8xf32, #tpu.memory_space<vmem>>, vector<1x16x8xf32>
    tpu.vector_store %arg8[%c0_23, %c0_24, %c0_25], %41 {strides = array<i32>} : memref<1x16x8xf32, #tpu.memory_space<vmem>>, vector<1x16x8xf32>,
    %43 = vector.shape_cast %31 : vector<16x8xf32> to vector<1x16x8xf32>
    %c0_26 = arith.constant 0 : index
    %c0_27 = arith.constant 0 : index
    %c0_28 = arith.constant 0 : index
    %44 = vector.load %arg9[%c0_26, %c0_27, %c0_28] : memref<1x16x8xf32, #tpu.memory_space<vmem>>, vector<1x16x8xf32>
    tpu.vector_store %arg9[%c0_26, %c0_27, %c0_28], %43 {strides = array<i32>} : memref<1x16x8xf32, #tpu.memory_space<vmem>>, vector<1x16x8xf32>,
    return
  }
  func.func @transform_0(%arg0: i32) -> (i32, i32, i32) {
    %c0_i32 = arith.constant 0 : i32
    %c0_i32_0 = arith.constant 0 : i32
    %c0_i32_1 = arith.constant 0 : i32
    return %arg0, %c0_i32, %c0_i32_0 : i32, i32, i32
  }
  func.func @transform_1(%arg0: i32) -> (i32, i32) {
    %c0_i32 = arith.constant 0 : i32
    %c0_i32_0 = arith.constant 0 : i32
    %c0_i32_1 = arith.constant 0 : i32
    return %c0_i32, %c0_i32_0 : i32, i32
  }
  func.func @transform_2(%arg0: i32) -> (i32, i32) {
    %c0_i32 = arith.constant 0 : i32
    %c0_i32_0 = arith.constant 0 : i32
    %c0_i32_1 = arith.constant 0 : i32
    return %c0_i32, %c0_i32_0 : i32, i32
  }
  func.func @transform_3(%arg0: i32) -> (i32, i32) {
    %c0_i32 = arith.constant 0 : i32
    %c0_i32_0 = arith.constant 0 : i32
    %c0_i32_1 = arith.constant 0 : i32
    return %c0_i32, %c0_i32_0 : i32, i32
  }
  func.func @transform_4(%arg0: i32) -> (i32, i32) {
    %c0_i32 = arith.constant 0 : i32
    %c0_i32_0 = arith.constant 0 : i32
    %c0_i32_1 = arith.constant 0 : i32
    return %c0_i32, %c0_i32_0 : i32, i32
  }
  func.func @transform_5(%arg0: i32) -> (i32, i32) {
    %c0_i32 = arith.constant 0 : i32
    %c0_i32_0 = arith.constant 0 : i32
    %c0_i32_1 = arith.constant 0 : i32
    return %c0_i32, %c0_i32_0 : i32, i32
  }
  func.func @transform_6(%arg0: i32) -> (i32, i32) {
    %c0_i32 = arith.constant 0 : i32
    %c0_i32_0 = arith.constant 0 : i32
    %c0_i32_1 = arith.constant 0 : i32
    return %c0_i32, %c0_i32_0 : i32, i32
  }
  func.func @transform_7(%arg0: i32) -> (i32, i32, i32) {
    %c0_i32 = arith.constant 0 : i32
    %c0_i32_0 = arith.constant 0 : i32
    %c0_i32_1 = arith.constant 0 : i32
    return %arg0, %c0_i32, %c0_i32_0 : i32, i32, i32
  }
  func.func @transform_8(%arg0: i32) -> (i32, i32, i32) {
    %c0_i32 = arith.constant 0 : i32
    %c0_i32_0 = arith.constant 0 : i32
    %c0_i32_1 = arith.constant 0 : i32
    return %arg0, %c0_i32, %c0_i32_0 : i32, i32, i32
  }
}

</mosaic_0001>

<llo_original>
// kernel: tpu_custom_call.1
$region0: #{tpu_custom_call.1}
  #allocation0 [shape = 'u32[]', space=smem, size = 0x4, offset = 0x4, fixed_abs, tag = 'smem constant byte address 0x4 - core index']
  #allocation1 [shape = 'u32[144,128]{1,0:T(1,128)}', space=vmem, size = 0x12000, scoped, tag = 'internal scratch']
  %s0 = inlined_call_operand.vmem [shape: f32[2,16,4], index: 0, kind: input, shape index: {}]
  %s1 = inlined_call_operand.vmem [shape: f32[12,8], index: 1, kind: input, shape index: {}]
  %s2 = inlined_call_operand.vmem [shape: f32[1,8], index: 2, kind: input, shape index: {}]
  %s3 = inlined_call_operand.vmem [shape: f32[24,8], index: 3, kind: input, shape index: {}]
  %s4 = inlined_call_operand.vmem [shape: f32[1,8], index: 4, kind: input, shape index: {}]
  %s5 = inlined_call_operand.vmem [shape: f32[4,8], index: 5, kind: input, shape index: {}]
  %s6 = inlined_call_operand.vmem [shape: f32[1,8], index: 6, kind: input, shape index: {}]
  %s7 = inlined_call_operand.vmem [shape: f32[2,16,8], index: 7, kind: output, shape index: {0}]
  %s8 = inlined_call_operand.vmem [shape: f32[2,16,8], index: 8, kind: output, shape index: {1}]
  %9 = xla_tuple %s7, %s8
  %s10 = sld [smem:[#allocation0]]
  $region69: #{tpu_custom_call.1} parent=0
    _
  %s12 = ssub.s32 1, %s10
  %s13 = scalar_select 0, %s12, %s10
  loop: start=0, step=1, limit=4
  $region2: #{tpu_custom_call.1} parent=0 // loop_pre_header
    _
  $region3: #{tpu_custom_call.1} parent=0 // loop_header
    %s15 = sphi 0, %s19
    %p16 = scmp.ge.s32.totalorder %s15, 4
    %s25 = sphi 0, %s27
    %s28 = sphi 0, %s25
    %s29 = sphi 0, %s28
    %s45 = sphi 0, %s29
    %s49 = sphi 0, %s49
    %s51 = sphi 0, %s49
    %s52 = sphi 0, %s51
    %s66 = sphi 0, %s52
    %s70 = sphi 0, %s70
    %s72 = sphi 0, %s70
    %s73 = sphi 0, %s72
    %s87 = sphi 0, %s73
    %s91 = sphi 0, %s91
    %s93 = sphi 0, %s91
    %s94 = sphi 0, %s93
    %s108 = sphi 0, %s94
    %s112 = sphi 0, %s112
    %s114 = sphi 0, %s112
    %s115 = sphi 0, %s114
    %s129 = sphi 0, %s115
    %s133 = sphi 0, %s133
    %s135 = sphi 0, %s133
    %s136 = sphi 0, %s135
    %s150 = sphi 0, %s136
    %s154 = sphi 0, %s154
    %s156 = sphi 0, %s154
    %s157 = sphi 0, %s156
    %s171 = sphi 0, %s157
    %s177 = sphi 0, %s179
    %s180 = sphi 0, %s177
    %s181 = sphi 0, %s180
    %s197 = sphi 0, %s181
    %s203 = sphi 0, %s205
    %s206 = sphi 0, %s203
    %s207 = sphi 0, %s206
    %s223 = sphi 0, %s207
  $region4: #{tpu_custom_call.1} parent=0 // loop_header_branch
    %18 = sbr.rel (%p16) target = $region8
  $region5: #{tpu_custom_call.1} parent=0 // loop_body
    %s20 = ssub.s32 %s15, 1
    %s21 = ssub.s32 %s15, 2
    %s22 = sadd.s32 %s15, 1
    %s23 = ssub.s32 %s15, %s22
    %p24 = scmp.eq.s32.totalorder %s23, 0
    %s26 = sadd.s32 %s25, 1
    %s27 = scalar_select %p24, %s25, %s26
    %p30 = pneg %p24
    %p31 = scmp.eq.s32.totalorder %s15, 1
    %p32 = por %p30, %p31
    %p33 = scmp.ne.s32.totalorder %s25, %s28
    %p34 = scmp.eq.s32.totalorder %s15, 0
    %p35 = por %p33, %p34
    %p36 = scmp.ne.s32.totalorder %s25, %s28
    %p37 = scmp.eq.s32.totalorder %s20, 1
    %p38 = por %p36, %p37
    %p39 = scmp.ne.s32.totalorder %s28, %s29
    %p40 = scmp.eq.s32.totalorder %s20, 0
    %p41 = por %p39, %p40
    %p42 = scmp.ne.s32.totalorder %s28, %s29
    %p43 = scmp.eq.s32.totalorder %s21, 1
    %p44 = por %p42, %p43
    %p46 = scmp.ne.s32.totalorder %s29, %s45
    %p47 = scmp.eq.s32.totalorder %s21, 0
    %p48 = por %p46, %p47
    %s50 = sadd.s32 %s49, 1
    %p53 = scmp.eq.s32.totalorder %s15, 1
    %p54 = scmp.ne.s32.totalorder %s49, %s51
    %p55 = scmp.eq.s32.totalorder %s15, 0
    %p56 = por %p54, %p55
    %p57 = scmp.ne.s32.totalorder %s49, %s51
    %p58 = scmp.eq.s32.totalorder %s20, 1
    %p59 = por %p57, %p58
    %p60 = scmp.ne.s32.totalorder %s51, %s52
    %p61 = scmp.eq.s32.totalorder %s20, 0
    %p62 = por %p60, %p61
    %p63 = scmp.ne.s32.totalorder %s51, %s52
    %p64 = scmp.eq.s32.totalorder %s21, 1
    %p65 = por %p63, %p64
    %p67 = scmp.ne.s32.totalorder %s52, %s66
    %p68 = scmp.eq.s32.totalorder %s21, 0
    %p69 = por %p67, %p68
    %s71 = sadd.s32 %s70, 1
    %p74 = scmp.eq.s32.totalorder %s15, 1
    %p75 = scmp.ne.s32.totalorder %s70, %s72
    %p76 = scmp.eq.s32.totalorder %s15, 0
    %p77 = por %p75, %p76
    %p78 = scmp.ne.s32.totalorder %s70, %s72
    %p79 = scmp.eq.s32.totalorder %s20, 1
    %p80 = por %p78, %p79
    %p81 = scmp.ne.s32.totalorder %s72, %s73
    %p82 = scmp.eq.s32.totalorder %s20, 0
    %p83 = por %p81, %p82
    %p84 = scmp.ne.s32.totalorder %s72, %s73
    %p85 = scmp.eq.s32.totalorder %s21, 1
    %p86 = por %p84, %p85
    %p88 = scmp.ne.s32.totalorder %s73, %s87
    %p89 = scmp.eq.s32.totalorder %s21, 0
    %p90 = por %p88, %p89
    %s92 = sadd.s32 %s91, 1
    %p95 = scmp.eq.s32.totalorder %s15, 1
    %p96 = scmp.ne.s32.totalorder %s91, %s93
    %p97 = scmp.eq.s32.totalorder %s15, 0
    %p98 = por %p96, %p97
    %p99 = scmp.ne.s32.totalorder %s91, %s93
    %p100 = scmp.eq.s32.totalorder %s20, 1
    %p101 = por %p99, %p100
    %p102 = scmp.ne.s32.totalorder %s93, %s94
    %p103 = scmp.eq.s32.totalorder %s20, 0
    %p104 = por %p102, %p103
    %p105 = scmp.ne.s32.totalorder %s93, %s94
    %p106 = scmp.eq.s32.totalorder %s21, 1
    %p107 = por %p105, %p106
    %p109 = scmp.ne.s32.totalorder %s94, %s108
    %p110 = scmp.eq.s32.totalorder %s21, 0
    %p111 = por %p109, %p110
    %s113 = sadd.s32 %s112, 1
    %p116 = scmp.eq.s32.totalorder %s15, 1
    %p117 = scmp.ne.s32.totalorder %s112, %s114
    %p118 = scmp.eq.s32.totalorder %s15, 0
    %p119 = por %p117, %p118
    %p120 = scmp.ne.s32.totalorder %s112, %s114
    %p121 = scmp.eq.s32.totalorder %s20, 1
    %p122 = por %p120, %p121
    %p123 = scmp.ne.s32.totalorder %s114, %s115
    %p124 = scmp.eq.s32.totalorder %s20, 0
    %p125 = por %p123, %p124
    %p126 = scmp.ne.s32.totalorder %s114, %s115
    %p127 = scmp.eq.s32.totalorder %s21, 1
    %p128 = por %p126, %p127
    %p130 = scmp.ne.s32.totalorder %s115, %s129
    %p131 = scmp.eq.s32.totalorder %s21, 0
    %p132 = por %p130, %p131
    %s134 = sadd.s32 %s133, 1
    %p137 = scmp.eq.s32.totalorder %s15, 1
    %p138 = scmp.ne.s32.totalorder %s133, %s135
    %p139 = scmp.eq.s32.totalorder %s15, 0
    %p140 = por %p138, %p139
    %p141 = scmp.ne.s32.totalorder %s133, %s135
    %p142 = scmp.eq.s32.totalorder %s20, 1
    %p143 = por %p141, %p142
    %p144 = scmp.ne.s32.totalorder %s135, %s136
    %p145 = scmp.eq.s32.totalorder %s20, 0
    %p146 = por %p144, %p145
    %p147 = scmp.ne.s32.totalorder %s135, %s136
    %p148 = scmp.eq.s32.totalorder %s21, 1
    %p149 = por %p147, %p148
    %p151 = scmp.ne.s32.totalorder %s136, %s150
    %p152 = scmp.eq.s32.totalorder %s21, 0
    %p153 = por %p151, %p152
    %s155 = sadd.s32 %s154, 1
    %p158 = scmp.eq.s32.totalorder %s15, 1
    %p159 = scmp.ne.s32.totalorder %s154, %s156
    %p160 = scmp.eq.s32.totalorder %s15, 0
    %p161 = por %p159, %p160
    %p162 = scmp.ne.s32.totalorder %s154, %s156
    %p163 = scmp.eq.s32.totalorder %s20, 1
    %p164 = por %p162, %p163
    %p165 = scmp.ne.s32.totalorder %s156, %s157
    %p166 = scmp.eq.s32.totalorder %s20, 0
    %p167 = por %p165, %p166
    %p168 = scmp.ne.s32.totalorder %s156, %s157
    %p169 = scmp.eq.s32.totalorder %s21, 1
    %p170 = por %p168, %p169
    %p172 = scmp.ne.s32.totalorder %s157, %s171
    %p173 = scmp.eq.s32.totalorder %s21, 0
    %p174 = por %p172, %p173
    %s175 = ssub.s32 %s15, %s22
    %p176 = scmp.eq.s32.totalorder %s175, 0
    %s178 = sadd.s32 %s177, 1
    %s179 = scalar_select %p176, %s177, %s178
    %p182 = pneg %p176
    %p183 = scmp.eq.s32.totalorder %s15, 1
    %p184 = por %p182, %p183
    %p185 = scmp.ne.s32.totalorder %s177, %s180
    %p186 = scmp.eq.s32.totalorder %s15, 0
    %p187 = por %p185, %p186
    %p188 = scmp.ne.s32.totalorder %s177, %s180
    %p189 = scmp.eq.s32.totalorder %s20, 1
    %p190 = por %p188, %p189
    %p191 = scmp.ne.s32.totalorder %s180, %s181
    %p192 = scmp.eq.s32.totalorder %s20, 0
    %p193 = por %p191, %p192
    %p194 = scmp.ne.s32.totalorder %s180, %s181
    %p195 = scmp.eq.s32.totalorder %s21, 1
    %p196 = por %p194, %p195
    %p198 = scmp.ne.s32.totalorder %s181, %s197
    %p199 = scmp.eq.s32.totalorder %s21, 0
    %p200 = por %p198, %p199
    %s201 = ssub.s32 %s15, %s22
    %p202 = scmp.eq.s32.totalorder %s201, 0
    %s204 = sadd.s32 %s203, 1
    %s205 = scalar_select %p202, %s203, %s204
    %p208 = pneg %p202
    %p209 = scmp.eq.s32.totalorder %s15, 1
    %p210 = por %p208, %p209
    %p211 = scmp.ne.s32.totalorder %s203, %s206
    %p212 = scmp.eq.s32.totalorder %s15, 0
    %p213 = por %p211, %p212
    %p214 = scmp.ne.s32.totalorder %s203, %s206
    %p215 = scmp.eq.s32.totalorder %s20, 1
    %p216 = por %p214, %p215
    %p217 = scmp.ne.s32.totalorder %s206, %s207
    %p218 = scmp.eq.s32.totalorder %s20, 0
    %p219 = por %p217, %p218
    %p220 = scmp.ne.s32.totalorder %s206, %s207
    %p221 = scmp.eq.s32.totalorder %s21, 1
    %p222 = por %p220, %p221
    %p224 = scmp.ne.s32.totalorder %s207, %s223
    %p225 = scmp.eq.s32.totalorder %s21, 0
    %p226 = por %p224, %p225
    %p227 = scmp.le.s32.totalorder 1, %s15
    %p228 = scmp.lt.s32.totalorder %s15, 3
    %p229 = pnand %p227, %p228
    %p230 = pneg %p229
    // Predicated region
    $region9: #{tpu_custom_call.1} parent=5 // pred_check
      _
    $region10: #{tpu_custom_call.1} parent=5 // pred_check_branch
      %232 = sbr.rel (%p229) target = $region12
    $region11: #{tpu_custom_call.1} parent=5 // pred_region
      %s233 = ssub.s32 %s15, 1
      // Predicated region
      $region13: #{tpu_custom_call.1} parent=11 // pred_check
        %p234 = pneg %p62
      $region14: #{tpu_custom_call.1} parent=11 // pred_check_branch
        %236 = sbr.rel (%p234) target = $region16
      $region15: #{tpu_custom_call.1} parent=11 // pred_region
        _
      $region16: #{tpu_custom_call.1} parent=11 // pred_fallthru
        _
      // Predicated region
      $region17: #{tpu_custom_call.1} parent=11 // pred_check
        %p237 = pneg %p83
      $region18: #{tpu_custom_call.1} parent=11 // pred_check_branch
        %239 = sbr.rel (%p237) target = $region20
      $region19: #{tpu_custom_call.1} parent=11 // pred_region
        _
      $region20: #{tpu_custom_call.1} parent=11 // pred_fallthru
        _
      // Predicated region
      $region21: #{tpu_custom_call.1} parent=11 // pred_check
        %p240 = pneg %p104
      $region22: #{tpu_custom_call.1} parent=11 // pred_check_branch
        %242 = sbr.rel (%p240) target = $region24
      $region23: #{tpu_custom_call.1} parent=11 // pred_region
        _
      $region24: #{tpu_custom_call.1} parent=11 // pred_fallthru
        _
      // Predicated region
      $region25: #{tpu_custom_call.1} parent=11 // pred_check
        %p243 = pneg %p125
      $region26: #{tpu_custom_call.1} parent=11 // pred_check_branch
        %245 = sbr.rel (%p243) target = $region28
      $region27: #{tpu_custom_call.1} parent=11 // pred_region
        _
      $region28: #{tpu_custom_call.1} parent=11 // pred_fallthru
        _
      // Predicated region
      $region29: #{tpu_custom_call.1} parent=11 // pred_check
        %p246 = pneg %p146
      $region30: #{tpu_custom_call.1} parent=11 // pred_check_branch
        %248 = sbr.rel (%p246) target = $region32
      $region31: #{tpu_custom_call.1} parent=11 // pred_region
        _
      $region32: #{tpu_custom_call.1} parent=11 // pred_fallthru
        _
      // Predicated region
      $region33: #{tpu_custom_call.1} parent=11 // pred_check
        %p249 = pneg %p167
      $region34: #{tpu_custom_call.1} parent=11 // pred_check_branch
        %251 = sbr.rel (%p249) target = $region36
      $region35: #{tpu_custom_call.1} parent=11 // pred_region
        _
      $region36: #{tpu_custom_call.1} parent=11 // pred_fallthru
        _
    $region12: #{tpu_custom_call.1} parent=5 // pred_fallthru
      _
    %p252 = scmp.lt.s32.totalorder %s15, 2
    // Predicated region
    $region37: #{tpu_custom_call.1} parent=5 // pred_check
      %p253 = pneg %p252
    $region38: #{tpu_custom_call.1} parent=5 // pred_check_branch
      %255 = sbr.rel (%p253) target = $region40
    $region39: #{tpu_custom_call.1} parent=5 // pred_region
      // Predicated region
      $region41: #{tpu_custom_call.1} parent=39 // pred_check
        %p256 = pneg %p35
      $region42: #{tpu_custom_call.1} parent=39 // pred_check_branch
        %258 = sbr.rel (%p256) target = $region44
      $region43: #{tpu_custom_call.1} parent=39 // pred_region
        %p259 = scmp.lt.s32.totalorder %s15, 1
        %s260 = scalar_select %p259, %s15, 1
        %s261 = smul.addr %s260, 2
        %s262 = smul.addr %s261, 8
        %s263 = scalar_lea.vmem %s0, %s262
      $region44: #{tpu_custom_call.1} parent=39 // pred_fallthru
        _
    $region40: #{tpu_custom_call.1} parent=5 // pred_fallthru
      _
    %p264 = scmp.le.s32.totalorder 1, %s15
    %p265 = scmp.lt.s32.totalorder %s15, 3
    %p266 = pnand %p264, %p265
    %p267 = pneg %p266
    // Predicated region
    $region45: #{tpu_custom_call.1} parent=5 // pred_check
      _
    $region46: #{tpu_custom_call.1} parent=5 // pred_check_branch
      %269 = sbr.rel (%p266) target = $region48
    $region47: #{tpu_custom_call.1} parent=5 // pred_region
      %s270 = ssub.s32 %s15, 1
      %p271 = scmp.lt.s32.totalorder %s20, 1
      %s272 = scalar_select %p271, %s20, 1
      %s273 = smul.addr %s272, 2
      %s274 = smul.addr %s273, 8
      %s275 = scalar_lea.vmem %s0, %s274
      %p276 = pneg %p41
      %p277 = pneg %p38
      %p278 = pneg %p62
      %p279 = pneg %p59
      %p280 = pneg %p83
      %p281 = pneg %p80
      %p282 = pneg %p104
      %p283 = pneg %p101
      %p284 = pneg %p125
      %p285 = pneg %p122
      %p286 = pneg %p146
      %p287 = pneg %p143
      %p288 = pneg %p167
      %p289 = pneg %p164
      %p290 = pneg %p193
      %p291 = pneg %p190
      %p292 = scmp.lt.s32.totalorder %s20, 1
      %s293 = scalar_select %p292, %s20, 1
      %s294 = smul.addr %s293, 2
      %s295 = smul.addr %s294, 8
      %s296 = scalar_lea.vmem %s7, %s295
      %p297 = pneg %p219
      %p298 = pneg %p216
      %p299 = scmp.lt.s32.totalorder %s20, 1
      %s300 = scalar_select %p299, %s20, 1
      %s301 = smul.addr %s300, 2
      %s302 = smul.addr %s301, 8
      %s303 = scalar_lea.vmem %s8, %s302
      %p304 = scmp.lt.s32.totalorder %s20, 1
      %s305 = scalar_select %p304, %s20, 1
      %s306 = smul.addr %s305, 2
      %s307 = smul.addr %s306, 8
      %s308 = scalar_lea.vmem %s0, %s307
      %p309 = scmp.lt.s32.totalorder %s20, 1
      %s310 = scalar_select %p309, %s20, 1
      %s311 = smul.addr %s310, 2
      %s312 = smul.addr %s311, 8
      %s313 = scalar_lea.vmem %s7, %s312
      %p314 = scmp.lt.s32.totalorder %s20, 1
      %s315 = scalar_select %p314, %s20, 1
      %s316 = smul.addr %s315, 2
      %s317 = smul.addr %s316, 8
      %s318 = scalar_lea.vmem %s8, %s317
      %v319 = vld [vmem:[%s308] sm:$0xff]
      %v320 = vld [vmem:[%s308 + $0x8] sm:$0xff]
      %vm323 = vcmask 1041408
      %v324 = vrot.slane %v319, 6
      %v325 = vrot.slane %v320, 6
      %v326 = vsel %vm323, %v324, %v325
      %v328 = vsel %vm323, 0.0, %v324
      %vm329 = vcmask 1043456
      %v330 = vrot.slane %v319, 4
      %v331 = vrot.slane %v320, 4
      %v332 = vsel %vm329, %v330, %v331
      %v334 = vsel %vm329, 0.0, %v330
      %336 = vrot.lane.b32.xlu0 %v328, 4
      %v337 = vpop.permute.xlu0 %336
      %338 = vrot.lane.b32.xlu0 %v326, 4
      %v339 = vpop.permute.xlu0 %338
      %343 = vrot.lane.b32.xlu0 %v334, 8
      %v344 = vpop.permute.xlu0 %343
      %345 = vrot.lane.b32.xlu0 %v332, 8
      %v346 = vpop.permute.xlu0 %345
      %vm349 = vcmask 31744
      %v350 = vsel %vm349, %v319, %v337
      %v351 = vsel %vm349, %v320, %v339
      %vm352 = vcmask 64512
      %v353 = vsel %vm352, %v350, %v344
      %v354 = vsel %vm352, %v351, %v346
      %v355 = vld [vmem:[%s1] sm:$0xff]
      %v356 = vld [vmem:[%s1 + $0x8] sm:$0xf]
      %v357 = vld [vmem:[%s2] sm:$0x1]
      %v359 = vlaneseq
      %v360 = vshrl.u32 %v359, 7
      %v361 = vsub.s32 0, %v360
      %v362 = vrot.slane %v357, %v361
      %vm364 = vcmask 97280
      %v366 = vsel %vm364, %v353, 0
      %v369 = vsel %vm364, %v354, 0
      %v372 = vsel %vm329, %v356, 0
      %374 = vmatprep.subr.mxu0 0.0
      %375 = vmatpush1.msra.mxu0 0.0
      %376 = vmatprep.subr.mxu0 0.0
      %377 = vmatpush1.msra.mxu0 0.0
      %378 = vmatprep.subr.mxu0 0.0
      %379 = vmatpush1.msra.mxu0 0.0
      %380 = vmatprep.subr.mxu0 0.0
      %381 = vmatpush1.msra.mxu0 0.0
      %382 = vmatprep.subr.mxu0 0.0
      %383 = vmatpush1.msra.mxu0 0.0
      %384 = vmatprep.subr.mxu0 0.0
      %385 = vmatpush1.msra.mxu0 0.0
      %386 = vmatprep.subr.mxu0 0.0
      %387 = vmatpush1.msra.mxu0 0.0
      %388 = vmatprep.subr.mxu0 0.0
      %389 = vmatpush1.msra.mxu0 0.0
      %390 = vmatprep.subr.mxu0 0.0
      %391 = vmatpush1.msra.mxu0 0.0
      %392 = vmatprep.subr.mxu0 0.0
      %393 = vmatpush1.msra.mxu0 0.0
      %394 = vmatprep.subr.mxu0 0.0
      %395 = vmatpush1.msra.mxu0 0.0
      %396 = vmatprep.subr.mxu0 0.0
      %397 = vmatpush1.msra.mxu0 0.0
      %398 = vmatprep.subr.mxu0 0.0
      %399 = vmatpush1.msra.mxu0 0.0
      %400 = vmatprep.subr.mxu0 0.0
      %401 = vmatpush1.msra.mxu0 0.0
      %402 = vmatprep.subr.mxu0 0.0
      %403 = vmatpush1.msra.mxu0 %v372
      %404 = vmatprep.subr.mxu0 0.0
      %405 = vmatpush1.msra.mxu0 %v355
      %406 = vmatprep.subr.mxu0 0.0
      %407 = vmatpush2.msra.mxu0 0.0
      %408 = vmatprep.subr.mxu0 0.0
      %409 = vmatpush2.msra.mxu0 0.0
      %410 = vmatprep.subr.mxu0 0.0
      %411 = vmatpush2.msra.mxu0 0.0
      %412 = vmatprep.subr.mxu0 0.0
      %413 = vmatpush2.msra.mxu0 0.0
      %414 = vmatprep.subr.mxu0 0.0
      %415 = vmatpush2.msra.mxu0 0.0
      %416 = vmatprep.subr.mxu0 0.0
      %417 = vmatpush2.msra.mxu0 0.0
      %418 = vmatprep.subr.mxu0 0.0
      %419 = vmatpush2.msra.mxu0 0.0
      %420 = vmatprep.subr.mxu0 0.0
      %421 = vmatpush2.msra.mxu0 0.0
      %422 = vmatprep.subr.mxu0 0.0
      %423 = vmatpush2.msra.mxu0 0.0
      %424 = vmatprep.subr.mxu0 0.0
      %425 = vmatpush2.msra.mxu0 0.0
      %426 = vmatprep.subr.mxu0 0.0
      %427 = vmatpush2.msra.mxu0 0.0
      %428 = vmatprep.subr.mxu0 0.0
      %429 = vmatpush2.msra.mxu0 0.0
      %430 = vmatprep.subr.mxu0 0.0
      %431 = vmatpush2.msra.mxu0 0.0
      %432 = vmatprep.subr.mxu0 0.0
      %433 = vmatpush2.msra.mxu0 0.0
      %434 = vmatprep.subr.mxu0 0.0
      %435 = vmatpush2.msra.mxu0 0.0
      %436 = vmatprep.subr.mxu0 0.0
      %437 = vmatpush2.msra.mxu0 0.0
      %438 = vmatprep.mubr.f32.mxu0 0.0
      %439 = vmatmul.mubr.f32.gmra.mxu0 %v366
      %v440 = vpop.f32.mrf.mxu0
      %v441 = vadd.f32 %v362, %v440
      %v442 = vpop.f32.mrf.mxu0
      %443 = vmatprep.mubr.f32.mxu0 0.0
      %444 = vmatmul.mubr.f32.gmra.mxu0 %v369
      %v445 = vpop.f32.mrf.mxu0
      %v446 = vadd.f32 %v362, %v445
      %v447 = vpop.f32.mrf.mxu0
      %448 = vdwg.mxu0
      %v449 = vmax.f32 %v441, 0.0
      %v450 = vmax.f32 %v446, 0.0
      %v453 = vrot.slane %v449, 6
      %v454 = vrot.slane %v450, 6
      %v455 = vsel %vm323, %v453, %v454
      %v457 = vsel %vm323, 0.0, %v453
      %v458 = vrot.slane %v449, 4
      %v459 = vrot.slane %v450, 4
      %v460 = vsel %vm329, %v458, %v459
      %v462 = vsel %vm329, 0.0, %v458
      %464 = vrot.lane.b32.xlu0 %v457, 8
      %v465 = vpop.permute.xlu0 %464
      %466 = vrot.lane.b32.xlu0 %v455, 8
      %v467 = vpop.permute.xlu0 %466
      %471 = vrot.lane.b32.xlu0 %v462, 16
      %v472 = vpop.permute.xlu0 %471
      %473 = vrot.lane.b32.xlu0 %v460, 16
      %v474 = vpop.permute.xlu0 %473
      %v477 = vsel %vm352, %v449, %v465
      %v478 = vsel %vm352, %v450, %v467
      %vm479 = vcmask 130048
      %v480 = vsel %vm479, %v477, %v472
      %v481 = vsel %vm479, %v478, %v474
      %v482 = vld [vmem:[%s3] sm:$0xff]
      %v483 = vld [vmem:[%s3 + $0x8] sm:$0xff]
      %v484 = vld [vmem:[%s3 + $0x10] sm:$0xff]
      %v485 = vld [vmem:[%s4] sm:$0x1]
      %v487 = vlaneseq
      %v488 = vshrl.u32 %v487, 7
      %v489 = vsub.s32 0, %v488
      %v490 = vrot.slane %v485, %v489
      %vm492 = vcmask 195584
      %v494 = vsel %vm492, %v480, 0
      %v497 = vsel %vm492, %v481, 0
      %499 = vmatprep.subr.mxu0 0.0
      %500 = vmatpush1.msra.mxu0 0.0
      %501 = vmatprep.subr.mxu0 0.0
      %502 = vmatpush1.msra.mxu0 0.0
      %503 = vmatprep.subr.mxu0 0.0
      %504 = vmatpush1.msra.mxu0 0.0
      %505 = vmatprep.subr.mxu0 0.0
      %506 = vmatpush1.msra.mxu0 0.0
      %507 = vmatprep.subr.mxu0 0.0
      %508 = vmatpush1.msra.mxu0 0.0
      %509 = vmatprep.subr.mxu0 0.0
      %510 = vmatpush1.msra.mxu0 0.0
      %511 = vmatprep.subr.mxu0 0.0
      %512 = vmatpush1.msra.mxu0 0.0
      %513 = vmatprep.subr.mxu0 0.0
      %514 = vmatpush1.msra.mxu0 0.0
      %515 = vmatprep.subr.mxu0 0.0
      %516 = vmatpush1.msra.mxu0 0.0
      %517 = vmatprep.subr.mxu0 0.0
      %518 = vmatpush1.msra.mxu0 0.0
      %519 = vmatprep.subr.mxu0 0.0
      %520 = vmatpush1.msra.mxu0 0.0
      %521 = vmatprep.subr.mxu0 0.0
      %522 = vmatpush1.msra.mxu0 0.0
      %523 = vmatprep.subr.mxu0 0.0
      %524 = vmatpush1.msra.mxu0 0.0
      %525 = vmatprep.subr.mxu0 0.0
      %526 = vmatpush1.msra.mxu0 %v484
      %527 = vmatprep.subr.mxu0 0.0
      %528 = vmatpush1.msra.mxu0 %v483
      %529 = vmatprep.subr.mxu0 0.0
      %530 = vmatpush1.msra.mxu0 %v482
      %531 = vmatprep.subr.mxu0 0.0
      %532 = vmatpush2.msra.mxu0 0.0
      %533 = vmatprep.subr.mxu0 0.0
      %534 = vmatpush2.msra.mxu0 0.0
      %535 = vmatprep.subr.mxu0 0.0
      %536 = vmatpush2.msra.mxu0 0.0
      %537 = vmatprep.subr.mxu0 0.0
      %538 = vmatpush2.msra.mxu0 0.0
      %539 = vmatprep.subr.mxu0 0.0
      %540 = vmatpush2.msra.mxu0 0.0
      %541 = vmatprep.subr.mxu0 0.0
      %542 = vmatpush2.msra.mxu0 0.0
      %543 = vmatprep.subr.mxu0 0.0
      %544 = vmatpush2.msra.mxu0 0.0
      %545 = vmatprep.subr.mxu0 0.0
      %546 = vmatpush2.msra.mxu0 0.0
      %547 = vmatprep.subr.mxu0 0.0
      %548 = vmatpush2.msra.mxu0 0.0
      %549 = vmatprep.subr.mxu0 0.0
      %550 = vmatpush2.msra.mxu0 0.0
      %551 = vmatprep.subr.mxu0 0.0
      %552 = vmatpush2.msra.mxu0 0.0
      %553 = vmatprep.subr.mxu0 0.0
      %554 = vmatpush2.msra.mxu0 0.0
      %555 = vmatprep.subr.mxu0 0.0
      %556 = vmatpush2.msra.mxu0 0.0
      %557 = vmatprep.subr.mxu0 0.0
      %558 = vmatpush2.msra.mxu0 0.0
      %559 = vmatprep.subr.mxu0 0.0
      %560 = vmatpush2.msra.mxu0 0.0
      %561 = vmatprep.subr.mxu0 0.0
      %562 = vmatpush2.msra.mxu0 0.0
      %563 = vmatprep.mubr.f32.mxu0 0.0
      %564 = vmatmul.mubr.f32.gmra.mxu0 %v494
      %v565 = vpop.f32.mrf.mxu0
      %v566 = vadd.f32 %v490, %v565
      %v567 = vpop.f32.mrf.mxu0
      %568 = vmatprep.mubr.f32.mxu0 0.0
      %569 = vmatmul.mubr.f32.gmra.mxu0 %v497
      %v570 = vpop.f32.mrf.mxu0
      %v571 = vadd.f32 %v490, %v570
      %v572 = vpop.f32.mrf.mxu0
      %573 = vdwg.mxu0
      %v574 = vmax.f32 %v566, 0.0
      %v575 = vmax.f32 %v571, 0.0
      %v576 = vld [vmem:[%s5] sm:$0xf]
      %v577 = vld [vmem:[%s6] sm:$0x1]
      %v579 = vlaneseq
      %v580 = vshrl.u32 %v579, 7
      %v581 = vsub.s32 0, %v580
      %v582 = vrot.slane %v577, %v581
      %v584 = vsel %vm349, %v319, 0
      %v586 = vsel %vm349, %v320, 0
      %v589 = vsel %vm329, %v576, 0
      %591 = vmatprep.subr.mxu0 0.0
      %592 = vmatpush1.msra.mxu0 0.0
      %593 = vmatprep.subr.mxu0 0.0
      %594 = vmatpush1.msra.mxu0 0.0
      %595 = vmatprep.subr.mxu0 0.0
      %596 = vmatpush1.msra.mxu0 0.0
      %597 = vmatprep.subr.mxu0 0.0
      %598 = vmatpush1.msra.mxu0 0.0
      %599 = vmatprep.subr.mxu0 0.0
      %600 = vmatpush1.msra.mxu0 0.0
      %601 = vmatprep.subr.mxu0 0.0
      %602 = vmatpush1.msra.mxu0 0.0
      %603 = vmatprep.subr.mxu0 0.0
      %604 = vmatpush1.msra.mxu0 0.0
      %605 = vmatprep.subr.mxu0 0.0
      %606 = vmatpush1.msra.mxu0 0.0
      %607 = vmatprep.subr.mxu0 0.0
      %608 = vmatpush1.msra.mxu0 0.0
      %609 = vmatprep.subr.mxu0 0.0
      %610 = vmatpush1.msra.mxu0 0.0
      %611 = vmatprep.subr.mxu0 0.0
      %612 = vmatpush1.msra.mxu0 0.0
      %613 = vmatprep.subr.mxu0 0.0
      %614 = vmatpush1.msra.mxu0 0.0
      %615 = vmatprep.subr.mxu0 0.0
      %616 = vmatpush1.msra.mxu0 0.0
      %617 = vmatprep.subr.mxu0 0.0
      %618 = vmatpush1.msra.mxu0 0.0
      %619 = vmatprep.subr.mxu0 0.0
      %620 = vmatpush1.msra.mxu0 0.0
      %621 = vmatprep.subr.mxu0 0.0
      %622 = vmatpush1.msra.mxu0 %v589
      %623 = vmatprep.subr.mxu0 0.0
      %624 = vmatpush2.msra.mxu0 0.0
      %625 = vmatprep.subr.mxu0 0.0
      %626 = vmatpush2.msra.mxu0 0.0
      %627 = vmatprep.subr.mxu0 0.0
      %628 = vmatpush2.msra.mxu0 0.0
      %629 = vmatprep.subr.mxu0 0.0
      %630 = vmatpush2.msra.mxu0 0.0
      %631 = vmatprep.subr.mxu0 0.0
      %632 = vmatpush2.msra.mxu0 0.0
      %633 = vmatprep.subr.mxu0 0.0
      %634 = vmatpush2.msra.mxu0 0.0
      %635 = vmatprep.subr.mxu0 0.0
      %636 = vmatpush2.msra.mxu0 0.0
      %637 = vmatprep.subr.mxu0 0.0
      %638 = vmatpush2.msra.mxu0 0.0
      %639 = vmatprep.subr.mxu0 0.0
      %640 = vmatpush2.msra.mxu0 0.0
      %641 = vmatprep.subr.mxu0 0.0
      %642 = vmatpush2.msra.mxu0 0.0
      %643 = vmatprep.subr.mxu0 0.0
      %644 = vmatpush2.msra.mxu0 0.0
      %645 = vmatprep.subr.mxu0 0.0
      %646 = vmatpush2.msra.mxu0 0.0
      %647 = vmatprep.subr.mxu0 0.0
      %648 = vmatpush2.msra.mxu0 0.0
      %649 = vmatprep.subr.mxu0 0.0
      %650 = vmatpush2.msra.mxu0 0.0
      %651 = vmatprep.subr.mxu0 0.0
      %652 = vmatpush2.msra.mxu0 0.0
      %653 = vmatprep.subr.mxu0 0.0
      %654 = vmatpush2.msra.mxu0 0.0
      %655 = vmatprep.mubr.f32.mxu0 0.0
      %656 = vmatmul.mubr.f32.gmra.mxu0 %v584
      %v657 = vpop.f32.mrf.mxu0
      %v658 = vadd.f32 %v582, %v657
      %v659 = vpop.f32.mrf.mxu0
      %660 = vmatprep.mubr.f32.mxu0 0.0
      %661 = vmatmul.mubr.f32.gmra.mxu0 %v586
      %v662 = vpop.f32.mrf.mxu0
      %v663 = vadd.f32 %v582, %v662
      %v664 = vpop.f32.mrf.mxu0
      %665 = vdwg.mxu0
      %v666 = vadd.f32 %v574, %v658
      %v667 = vadd.f32 %v575, %v663
      %v668 = vmax.f32 %v666, 0.0
      %v669 = vmax.f32 %v667, 0.0
      %670 = vst.msk [vmem:[%s313] sm:$0xff] %vm352, %v668
      %671 = vst.msk [vmem:[%s313 + $0x8] sm:$0xff] %vm352, %v669
      %672 = vst.msk [vmem:[%s318] sm:$0xff] %vm352, %v574
      %673 = vst.msk [vmem:[%s318 + $0x8] sm:$0xff] %vm352, %v575
      %p674 = scmp.lt.s32.totalorder %s20, 1
      %s675 = scalar_select %p674, %s20, 1
      %s676 = smul.addr %s675, 2
      %s677 = smul.addr %s676, 8
      %s678 = scalar_lea.vmem %s7, %s677
      %p679 = scmp.lt.s32.totalorder %s20, 1
      %s680 = scalar_select %p679, %s20, 1
      %s681 = smul.addr %s680, 2
      %s682 = smul.addr %s681, 8
      %s683 = scalar_lea.vmem %s8, %s682
      // Predicated region
      $region49: #{tpu_custom_call.1} parent=47 // pred_check
        %p684 = pneg %p190
      $region50: #{tpu_custom_call.1} parent=47 // pred_check_branch
        %686 = sbr.rel (%p684) target = $region52
      $region51: #{tpu_custom_call.1} parent=47 // pred_region
        _
      $region52: #{tpu_custom_call.1} parent=47 // pred_fallthru
        _
      // Predicated region
      $region53: #{tpu_custom_call.1} parent=47 // pred_check
        %p687 = pneg %p216
      $region54: #{tpu_custom_call.1} parent=47 // pred_check_branch
        %689 = sbr.rel (%p687) target = $region56
      $region55: #{tpu_custom_call.1} parent=47 // pred_region
        _
      $region56: #{tpu_custom_call.1} parent=47 // pred_fallthru
        _
    $region48: #{tpu_custom_call.1} parent=5 // pred_fallthru
      _
    %p690 = scmp.le.s32.totalorder 2, %s15
    // Predicated region
    $region57: #{tpu_custom_call.1} parent=5 // pred_check
      %p691 = pneg %p690
    $region58: #{tpu_custom_call.1} parent=5 // pred_check_branch
      %693 = sbr.rel (%p691) target = $region60
    $region59: #{tpu_custom_call.1} parent=5 // pred_region
      %s694 = ssub.s32 %s15, 2
      // Predicated region
      $region61: #{tpu_custom_call.1} parent=59 // pred_check
        %p695 = pneg %p196
      $region62: #{tpu_custom_call.1} parent=59 // pred_check_branch
        %697 = sbr.rel (%p695) target = $region64
      $region63: #{tpu_custom_call.1} parent=59 // pred_region
        %p698 = scmp.lt.s32.totalorder %s21, 1
        %s699 = scalar_select %p698, %s21, 1
        %s700 = smul.addr %s699, 2
        %s701 = smul.addr %s700, 8
        %s702 = scalar_lea.vmem %s7, %s701
      $region64: #{tpu_custom_call.1} parent=59 // pred_fallthru
        _
      // Predicated region
      $region65: #{tpu_custom_call.1} parent=59 // pred_check
        %p703 = pneg %p222
      $region66: #{tpu_custom_call.1} parent=59 // pred_check_branch
        %705 = sbr.rel (%p703) target = $region68
      $region67: #{tpu_custom_call.1} parent=59 // pred_region
        %p706 = scmp.lt.s32.totalorder %s21, 1
        %s707 = scalar_select %p706, %s21, 1
        %s708 = smul.addr %s707, 2
        %s709 = smul.addr %s708, 8
        %s710 = scalar_lea.vmem %s8, %s709
      $region68: #{tpu_custom_call.1} parent=59 // pred_fallthru
        _
    $region60: #{tpu_custom_call.1} parent=5 // pred_fallthru
      _
  $region6: #{tpu_custom_call.1} parent=0 // loop_footer
    %s19 = sadd.s32 1, %s15
  $region7: #{tpu_custom_call.1} parent=0 // loop_footer_branch
    %14 = sbr.rel target = $region3
  $region8: #{tpu_custom_call.1} parent=0 // loop_exit
    _

</llo_original>
